<compile_context>
chip_gen: v6e
topology: v6e:2x2x1
jax: 0.10.0
libtpu: 0.0.40
codegen_flags: <defaults>
</compile_context>

<pallas_src>
import jax
import jax.numpy as jnp
import numpy as np
from jax.experimental import pallas as pl
from jax.experimental.pallas import tpu as pltpu

_MASK_FILL = -1e30  # large finite negative: exp(_MASK_FILL - max) == 0, no NaN on all-masked rows


def softdot_kernel(h_ref, ctx_ref, len_ref, w_in_ref, w_out_c_ref, w_out_h_ref,
                   h_tilde_ref, attn_ref):
    # MXU operands stay in the input dtype (bf16 in the demo); accumulate in f32.
    h = h_ref[...]                                            # (BB, Q)

    # target = linear_in(h)                                   -> (BB, C)  [MXU]
    target = jnp.dot(h, w_in_ref[...], preferred_element_type=jnp.float32)

    bb, s, _ = ctx_ref.shape

    # attn logits = bmm(context, target.unsqueeze(2))         -> (BB, S)  [VPU mul + XLU lane-reduce]
    # ctx upcast is folded into the multiply at the use site; no (BB,S,C) f32 copy
    # stays live across the softmax.
    # TODO(synk): on v6e/v7x the product can be done in bf16 (sum with dtype=f32)
    # to halve VALU/vld work; kept f32 here to match the f32 PyTorch forward.
    logits = jnp.sum(ctx_ref[...].astype(jnp.float32) * target[:, None, :], axis=-1)

    # mask built in-kernel from lengths: valid iff s < lengths[b]
    lane = jax.lax.broadcasted_iota(jnp.int32, (bb, s), 1)
    valid = lane < len_ref[...]                               # (BB, 1) int32 broadcast over lanes
    logits = jnp.where(valid, logits, jnp.float32(_MASK_FILL))

    # softmax over seq_len (f32); normalize with EUP reciprocal (frees VALU)
    m = jnp.max(logits, axis=-1, keepdims=True)
    e = jnp.exp(logits - m)
    inv = pl.reciprocal(jnp.sum(e, axis=-1, keepdims=True), approx=True)
    attn = e * inv                                            # (BB, S) f32

    # attn store: unpadded (BB, S). At S << 128 one masked vst beats building
    # 120 zero lanes + a layout copy every step.
    attn_ref[...] = attn.astype(attn_ref.dtype)

    # weighted_context = bmm(attn, context)                   -> (BB, C)  [VPU + XLU sublane-reduce]
    # re-read ctx (second short-lived use; cast folded into the multiply again)
    wc = jnp.sum(attn[:, :, None] * ctx_ref[...].astype(jnp.float32), axis=1)

    # h_tilde = tanh(linear_out(cat(wc, h)))                  -> (BB, Q_pad) [MXU + EUP]
    # w_out_* columns are pre-padded to Q_pad in the wrapper, so this store is
    # lane-dense with zero in-kernel padding cost (tanh(0) == 0 in the pad).
    pre = (jnp.dot(wc.astype(w_out_c_ref.dtype), w_out_c_ref[...],
                   preferred_element_type=jnp.float32)
           + jnp.dot(h, w_out_h_ref[...], preferred_element_type=jnp.float32))
    h_tilde_ref[...] = jnp.tanh(pre).astype(h_tilde_ref.dtype)


def _round_up(x, m):
    return (x + m - 1) // m * m


def soft_dot_attention(h, context, lengths, w_in, w_out, *, block_b=None):
    """Pallas wrapper.  Grid tiles the batch; weights broadcast to every tile."""
    B, Q = h.shape
    _, S, C = context.shape
    assert w_in.shape == (Q, C) and w_out.shape == (Q + C, Q)

    if block_b is None:
        # Target grid >= 2 so both v7x TensorCores get work and input/output DMA
        # overlaps compute; cap at 128 rows so the MXU M dimension stays full.
        # Re-derive against v7x's 64 MiB VMEM if S*C grows
        # (ctx double-buffer = 2 * block_b * S * C * itemsize).
        block_b = min(128, max(8, _round_up(-(-B // 2), 8)))
    assert block_b % 8 == 0

    # Pad the batch to a multiple of block_b; padded rows get lengths=0 (fully
    # masked -> uniform attn, harmless) and are sliced off below.
    B_pad = _round_up(B, block_b)
    lengths2d = lengths.astype(jnp.int32).reshape(B, 1)
    if B_pad != B:
        pad = B_pad - B
        h_in = jnp.pad(h, ((0, pad), (0, 0)))
        ctx_in = jnp.pad(context, ((0, pad), (0, 0), (0, 0)))
        lengths2d = jnp.pad(lengths2d, ((0, pad), (0, 0)))
    else:
        h_in, ctx_in = h, context

    # Split linear_out and pre-pad its output columns to Q_pad (one-time wrapper
    # cost) so the kernel's h_tilde store is lane-dense for free.
    Q_pad = _round_up(Q, 128)
    w_out_c = w_out[:C, :]                      # weighted_context half of cat()
    w_out_h = w_out[C:, :]                      # h half of cat()
    if Q_pad != Q:
        w_out_c = jnp.pad(w_out_c, ((0, 0), (0, Q_pad - Q)))
        w_out_h = jnp.pad(w_out_h, ((0, 0), (0, Q_pad - Q)))

    out_shapes = (jax.ShapeDtypeStruct((B_pad, Q_pad), h.dtype),
                  jax.ShapeDtypeStruct((B_pad, S), jnp.float32))

    itemsize = np.dtype(h.dtype).itemsize
    cost = pl.CostEstimate(
        flops=2 * B_pad * (Q * C + 2 * S * C + (C + Q) * Q_pad),
        transcendentals=B_pad * (S + Q_pad),
        bytes_accessed=(B_pad * (Q + S * C) * itemsize          # h, context
                        + (Q * C + (C + Q) * Q_pad) * itemsize  # weights
                        + B_pad * (Q_pad * itemsize + S * 4)),  # outputs
    )

    h_tilde_p, attn_p = pl.pallas_call(
        softdot_kernel,
        out_shape=out_shapes,
        grid=(B_pad // block_b,),
        in_specs=[
            pl.BlockSpec((block_b, Q), lambda i: (i, 0)),         # h
            pl.BlockSpec((block_b, S, C), lambda i: (i, 0, 0)),   # context
            pl.BlockSpec((block_b, 1), lambda i: (i, 0)),         # lengths column (i32)
            # Weights: constant index_map, so the re-DMA across grid steps is elided.
            # TODO(synk): for large C/Q add pipeline_mode=pl.Buffered(1) on these three
            # specs to drop the second (useless) weight buffer and free VMEM headroom
            # (matters most on v7x's 64 MiB VMEM).
            pl.BlockSpec((Q, C), lambda i: (0, 0)),               # w_in
            pl.BlockSpec((C, Q_pad), lambda i: (0, 0)),           # w_out (ctx part, col-padded)
            pl.BlockSpec((Q, Q_pad), lambda i: (0, 0)),           # w_out (h part, col-padded)
        ],
        out_specs=(
            pl.BlockSpec((block_b, Q_pad), lambda i: (i, 0)),     # h_tilde (lane-dense)
            pl.BlockSpec((block_b, S), lambda i: (i, 0)),         # attn    (unpadded)
        ),
        compiler_params=pltpu.CompilerParams(
            dimension_semantics=("parallel",)),
        cost_estimate=cost,
    )(h_in, ctx_in, lengths2d, w_in, w_out_c, w_out_h)

    if B_pad != B:
        h_tilde_p = h_tilde_p[:B]
        attn_p = attn_p[:B]
    h_tilde = h_tilde_p[:, :Q] if Q_pad != Q else h_tilde_p
    return h_tilde, attn_p


def reference(h, context, lengths, w_in, w_out):
    """Pure-JAX f32 mirror of the PyTorch forward (mask rebuilt from lengths)."""
    h32 = h.astype(jnp.float32)
    ctx32 = context.astype(jnp.float32)
    w_in32 = w_in.astype(jnp.float32)
    w_out32 = w_out.astype(jnp.float32)

    target = h32 @ w_in32
    logits = jnp.sum(ctx32 * target[:, None, :], axis=-1)
    S = context.shape[1]
    mask = jnp.arange(S)[None, :] >= lengths[:, None]
    logits = jnp.where(mask, jnp.float32(_MASK_FILL), logits)
    attn = jax.nn.softmax(logits, axis=-1)
    wc = jnp.sum(attn[:, :, None] * ctx32, axis=1)
    h_tilde = jnp.tanh(jnp.concatenate([wc, h32], axis=1) @ w_out32)
    return h_tilde, attn


if __name__ == "__main__":
    B, S, Q, C = 16, 8, 64, 128   # batch, seq_len, query_dim, ctx_dim

    key = jax.random.PRNGKey(0)
    k_h, k_ctx, k_win, k_wout = jax.random.split(key, 4)

    # bf16 inputs: halves HBM traffic for context (the dominant bytes) and feeds the
    # MXU its native operand dtype.  All softmax / tanh math stays in f32 in-kernel.
    h = jax.random.normal(k_h, (B, Q), dtype=jnp.float32).astype(jnp.bfloat16)
    context = jax.random.normal(k_ctx, (B, S, C), dtype=jnp.float32).astype(jnp.bfloat16)
    w_in = (jax.random.normal(k_win, (Q, C), dtype=jnp.float32)
            * (1.0 / np.sqrt(Q))).astype(jnp.bfloat16)
    w_out = (jax.random.normal(k_wout, (Q + C, Q), dtype=jnp.float32)
             * (1.0 / np.sqrt(Q + C))).astype(jnp.bfloat16)

    # Deterministic lengths: position s is valid iff s < lengths[b]; no fully-masked row.
    lengths = jnp.asarray((np.arange(B) % S) + 1, dtype=jnp.int32)

    h_tilde, attn = soft_dot_attention(h, context, lengths, w_in, w_out)
    jax.block_until_ready((h_tilde, attn))

    h_tilde_ref, attn_ref = reference(h, context, lengths, w_in, w_out)

    np.testing.assert_allclose(
        np.asarray(attn.astype(jnp.float32)),
        np.asarray(attn_ref.astype(jnp.float32)),
        rtol=2e-3, atol=2e-3)
    np.testing.assert_allclose(
        np.asarray(h_tilde.astype(jnp.float32)),
        np.asarray(h_tilde_ref.astype(jnp.float32)),
        rtol=3e-2, atol=3e-2)

    print("KERNEL_OK")
</pallas_src>

<mosaic_0001>
module attributes {stable_mosaic.version = 11 : i64} {
  func.func @softdot_kernel(%arg0: i32, %arg1: memref<8x64xbf16, #tpu.memory_space<vmem>>, %arg2: memref<8x8x128xbf16, #tpu.memory_space<vmem>>, %arg3: memref<8x1xi32, #tpu.memory_space<vmem>>, %arg4: memref<64x128xbf16, #tpu.memory_space<vmem>>, %arg5: memref<128x128xbf16, #tpu.memory_space<vmem>>, %arg6: memref<64x128xbf16, #tpu.memory_space<vmem>>, %arg7: memref<8x128xbf16, #tpu.memory_space<vmem>>, %arg8: memref<8x8xf32, #tpu.memory_space<vmem>>) attributes {dimension_semantics = [#tpu.dimension_semantics<parallel>], iteration_bounds = array<i64: 2>, scalar_prefetch = 0 : i64, scratch_operands = 0 : i64, tpu.core_type = #tpu.core_type<tc>, window_params = [{transform_indices = @transform_0, window_bounds = array<i64: 8, 64>}, {transform_indices = @transform_1, window_bounds = array<i64: 8, 8, 128>}, {transform_indices = @transform_2, window_bounds = array<i64: 8, 1>}, {pipeline_mode = #tpu.pipeline_mode<synchronous>, transform_indices = @transform_3, window_bounds = array<i64: 64, 128>}, {pipeline_mode = #tpu.pipeline_mode<synchronous>, transform_indices = @transform_4, window_bounds = array<i64: 128, 128>}, {pipeline_mode = #tpu.pipeline_mode<synchronous>, transform_indices = @transform_5, window_bounds = array<i64: 64, 128>}, {transform_indices = @transform_6, window_bounds = array<i64: 8, 128>}, {transform_indices = @transform_7, window_bounds = array<i64: 8, 8>}]} {
    %c0 = arith.constant 0 : index
    %c0_0 = arith.constant 0 : index
    %0 = vector.load %arg1[%c0, %c0_0] : memref<8x64xbf16, #tpu.memory_space<vmem>>, vector<8x64xbf16>
    %c0_1 = arith.constant 0 : index
    %c0_2 = arith.constant 0 : index
    %1 = vector.load %arg4[%c0_1, %c0_2] : memref<64x128xbf16, #tpu.memory_space<vmem>>, vector<64x128xbf16>
    %cst = arith.constant dense<0.000000e+00> : vector<8x128xf32>
    %2 = tpu.matmul %0, %1, %cst {dimension_numbers = #tpu.dot_dimension_numbers<[1], [0], [0], [1], [0, 0, 1, 1], [], []>} : vector<8x64xbf16>, vector<64x128xbf16>, vector<8x128xf32> -> vector<8x128xf32>
    %c0_3 = arith.constant 0 : index
    %c0_4 = arith.constant 0 : index
    %c0_5 = arith.constant 0 : index
    %3 = vector.load %arg2[%c0_3, %c0_4, %c0_5] : memref<8x8x128xbf16, #tpu.memory_space<vmem>>, vector<8x8x128xbf16>
    %4 = arith.extf %3 : vector<8x8x128xbf16> to vector<8x8x128xf32>
    %5 = vector.shape_cast %2 : vector<8x128xf32> to vector<8x1x128xf32>
    %6 = vector.broadcast %5 : vector<8x1x128xf32> to vector<8x8x128xf32>
    %7 = arith.mulf %4, %6 : vector<8x8x128xf32>
    %cst_6 = arith.constant dense<0.000000e+00> : vector<8x8xf32>
    %8 = vector.multi_reduction <add>, %7, %cst_6 [2] : vector<8x8x128xf32> to vector<8x8xf32>
    %9 = tpu.iota {dimensions = array<i32: 1>} : vector<8x8xi32>
    %c0_7 = arith.constant 0 : index
    %c0_8 = arith.constant 0 : index
    %10 = vector.load %arg3[%c0_7, %c0_8] : memref<8x1xi32, #tpu.memory_space<vmem>>, vector<8x1xi32>
    %11 = vector.broadcast %10 : vector<8x1xi32> to vector<8x8xi32>
    %12 = arith.cmpi slt, %9, %11 : vector<8x8xi32>
    %cst_9 = arith.constant -1.000000e+30 : f32
    %13 = vector.broadcast %cst_9 : f32 to vector<8x8xf32>
    %14 = arith.select %12, %8, %13 : vector<8x8xi1>, vector<8x8xf32>
    %cst_10 = arith.constant dense<0xFF800000> : vector<8xf32>
    %15 = vector.multi_reduction <maximumf>, %14, %cst_10 [1] : vector<8x8xf32> to vector<8xf32>
    %16 = vector.shape_cast %15 : vector<8xf32> to vector<8x1xf32>
    %17 = vector.broadcast %16 : vector<8x1xf32> to vector<8x8xf32>
    %18 = arith.subf %14, %17 : vector<8x8xf32>
    %19 = math.exp %18 : vector<8x8xf32>
    %cst_11 = arith.constant dense<0.000000e+00> : vector<8xf32>
    %20 = vector.multi_reduction <add>, %19, %cst_11 [1] : vector<8x8xf32> to vector<8xf32>
    %21 = vector.shape_cast %20 : vector<8xf32> to vector<8x1xf32>
    %22 = tpu.reciprocal %21 {approx = true} : vector<8x1xf32> -> vector<8x1xf32>
    %23 = vector.broadcast %22 : vector<8x1xf32> to vector<8x8xf32>
    %24 = arith.mulf %19, %23 : vector<8x8xf32>
    %c0_12 = arith.constant 0 : index
    %c0_13 = arith.constant 0 : index
    %25 = vector.load %arg8[%c0_12, %c0_13] : memref<8x8xf32, #tpu.memory_space<vmem>>, vector<8x8xf32>
    tpu.vector_store %arg8[%c0_12, %c0_13], %24 {strides = array<i32>} : memref<8x8xf32, #tpu.memory_space<vmem>>, vector<8x8xf32>,
    %26 = vector.shape_cast %24 : vector<8x8xf32> to vector<8x8x1xf32>
    %c0_14 = arith.constant 0 : index
    %c0_15 = arith.constant 0 : index
    %c0_16 = arith.constant 0 : index
    %27 = vector.load %arg2[%c0_14, %c0_15, %c0_16] : memref<8x8x128xbf16, #tpu.memory_space<vmem>>, vector<8x8x128xbf16>
    %28 = arith.extf %27 : vector<8x8x128xbf16> to vector<8x8x128xf32>
    %29 = vector.broadcast %26 : vector<8x8x1xf32> to vector<8x8x128xf32>
    %30 = arith.mulf %29, %28 : vector<8x8x128xf32>
    %cst_17 = arith.constant dense<0.000000e+00> : vector<8x128xf32>
    %31 = vector.multi_reduction <add>, %30, %cst_17 [1] : vector<8x8x128xf32> to vector<8x128xf32>
    %32 = arith.truncf %31 : vector<8x128xf32> to vector<8x128xbf16>
    %c0_18 = arith.constant 0 : index
    %c0_19 = arith.constant 0 : index
    %33 = vector.load %arg5[%c0_18, %c0_19] : memref<128x128xbf16, #tpu.memory_space<vmem>>, vector<128x128xbf16>
    %cst_20 = arith.constant dense<0.000000e+00> : vector<8x128xf32>
    %34 = tpu.matmul %32, %33, %cst_20 {dimension_numbers = #tpu.dot_dimension_numbers<[1], [0], [0], [1], [0, 0, 1, 1], [], []>} : vector<8x128xbf16>, vector<128x128xbf16>, vector<8x128xf32> -> vector<8x128xf32>
    %c0_21 = arith.constant 0 : index
    %c0_22 = arith.constant 0 : index
    %35 = vector.load %arg6[%c0_21, %c0_22] : memref<64x128xbf16, #tpu.memory_space<vmem>>, vector<64x128xbf16>
    %cst_23 = arith.constant dense<0.000000e+00> : vector<8x128xf32>
    %36 = tpu.matmul %0, %35, %cst_23 {dimension_numbers = #tpu.dot_dimension_numbers<[1], [0], [0], [1], [0, 0, 1, 1], [], []>} : vector<8x64xbf16>, vector<64x128xbf16>, vector<8x128xf32> -> vector<8x128xf32>
    %37 = arith.addf %34, %36 : vector<8x128xf32>
    %38 = math.tanh %37 : vector<8x128xf32>
    %39 = arith.truncf %38 : vector<8x128xf32> to vector<8x128xbf16>
    %c0_24 = arith.constant 0 : index
    %c0_25 = arith.constant 0 : index
    %40 = vector.load %arg7[%c0_24, %c0_25] : memref<8x128xbf16, #tpu.memory_space<vmem>>, vector<8x128xbf16>
    tpu.vector_store %arg7[%c0_24, %c0_25], %39 {strides = array<i32>} : memref<8x128xbf16, #tpu.memory_space<vmem>>, vector<8x128xbf16>,
    return
  }
  func.func @transform_0(%arg0: i32) -> (i32, i32) {
    %c0_i32 = arith.constant 0 : i32
    %c0_i32_0 = arith.constant 0 : i32
    return %arg0, %c0_i32 : i32, i32
  }
  func.func @transform_1(%arg0: i32) -> (i32, i32, i32) {
    %c0_i32 = arith.constant 0 : i32
    %c0_i32_0 = arith.constant 0 : i32
    %c0_i32_1 = arith.constant 0 : i32
    return %arg0, %c0_i32, %c0_i32_0 : i32, i32, i32
  }
  func.func @transform_2(%arg0: i32) -> (i32, i32) {
    %c0_i32 = arith.constant 0 : i32
    %c0_i32_0 = arith.constant 0 : i32
    return %arg0, %c0_i32 : i32, i32
  }
  func.func @transform_3(%arg0: i32) -> (i32, i32) {
    %c0_i32 = arith.constant 0 : i32
    %c0_i32_0 = arith.constant 0 : i32
    %c0_i32_1 = arith.constant 0 : i32
    return %c0_i32, %c0_i32_0 : i32, i32
  }
  func.func @transform_4(%arg0: i32) -> (i32, i32) {
    %c0_i32 = arith.constant 0 : i32
    %c0_i32_0 = arith.constant 0 : i32
    %c0_i32_1 = arith.constant 0 : i32
    return %c0_i32, %c0_i32_0 : i32, i32
  }
  func.func @transform_5(%arg0: i32) -> (i32, i32) {
    %c0_i32 = arith.constant 0 : i32
    %c0_i32_0 = arith.constant 0 : i32
    %c0_i32_1 = arith.constant 0 : i32
    return %c0_i32, %c0_i32_0 : i32, i32
  }
  func.func @transform_6(%arg0: i32) -> (i32, i32) {
    %c0_i32 = arith.constant 0 : i32
    %c0_i32_0 = arith.constant 0 : i32
    return %arg0, %c0_i32 : i32, i32
  }
  func.func @transform_7(%arg0: i32) -> (i32, i32) {
    %c0_i32 = arith.constant 0 : i32
    %c0_i32_0 = arith.constant 0 : i32
    return %arg0, %c0_i32 : i32, i32
  }
}

</mosaic_0001>

<llo_original>
// kernel: tpu_custom_call.1
$region0: #{tpu_custom_call.1}
  #allocation0 [shape = 'u32[]', space=smem, size = 0x4, offset = 0x4, fixed_abs, tag = 'smem constant byte address 0x4 - core index']
  #allocation1 [shape = 'u32[144,128]{1,0:T(1,128)}', space=vmem, size = 0x12000, scoped, tag = 'internal scratch']
  %s0 = inlined_call_operand.vmem [shape: bf16[16,64], index: 0, kind: input, shape index: {}]
  %s1 = inlined_call_operand.hbm [shape: bf16[16,8,128], index: 1, kind: input, shape index: {}]
  %s2 = inlined_call_operand.vmem [shape: s32[16,1], index: 2, kind: input, shape index: {}]
  %s3 = inlined_call_operand.hbm [shape: bf16[64,128], index: 3, kind: input, shape index: {}]
  %s4 = inlined_call_operand.hbm [shape: bf16[128,128], index: 4, kind: input, shape index: {}]
  %s5 = inlined_call_operand.hbm [shape: bf16[64,128], index: 5, kind: input, shape index: {}]
  %s6 = inlined_call_operand.hbm [shape: bf16[16,128], index: 6, kind: output, shape index: {0}]
  %s7 = inlined_call_operand.vmem [shape: f32[16,8], index: 7, kind: output, shape index: {1}]
  %8 = xla_tuple %s6, %s7
  %s9 = sld [smem:[#allocation0]]
  $region81: #{tpu_custom_call.1} parent=0
    _
  %s11 = ssub.s32 1, %s9
  %s12 = scalar_select 0, %s11, %s9
  $region1: #{tpu_custom_call.1} parent=0
    #allocation2 [shape = 'u8[32768]{0}', space=vmem, size = 0x8000, scoped, tag = 'input window, operand 1']
    #allocation3 [shape = 's32[2]{0}', space=sflag, size = 0x8, scoped, tag = 'scoped memory for tpu_custom_call.1']
    #allocation4 [shape = 's32[2]{0}', space=sflag, size = 0x8, scoped, tag = 'scoped memory for tpu_custom_call.1']
    #allocation5 [shape = 'u8[16384]{0}', space=vmem, size = 0x4000, scoped, tag = 'input window, operand 3, single buffered']
    #allocation6 [shape = 's32[1]{0}', space=sflag, size = 0x4, scoped, tag = 'scoped memory for tpu_custom_call.1']
    #allocation7 [shape = 'u8[32768]{0}', space=vmem, size = 0x8000, scoped, tag = 'input window, operand 4, single buffered']
    #allocation8 [shape = 'u8[16384]{0}', space=vmem, size = 0x4000, scoped, tag = 'input window, operand 5, single buffered']
    #allocation9 [shape = 's32[1]{0}', space=sflag, size = 0x4, scoped, tag = 'scoped memory for tpu_custom_call.1']
    #allocation10 [shape = 'u8[4096]{0}', space=vmem, size = 0x1000, scoped, tag = 'output window, operand 0']
    %13 = vsyncpa [#allocation3], 0
    %s14 = scalar_lea.sflag [#allocation3], 1
    %15 = vsyncpa %s14, 0
    %16 = vsyncpa [#allocation6], 0
    %17 = vsyncpa [#allocation9], 0
    %18 = vsyncpa [#allocation4], 0
    %s19 = scalar_lea.sflag [#allocation4], 1
    %20 = vsyncpa %s19, 0
    loop: start=0, step=1, limit=4
    $region2: #{tpu_custom_call.1} parent=1 // loop_pre_header
      _
    $region3: #{tpu_custom_call.1} parent=1 // loop_header
      %s22 = sphi 0, %s26
      %p23 = scmp.ge.s32.totalorder %s22, 4
      %s32 = sphi 0, %s34
      %s35 = sphi 0, %s32
      %s36 = sphi 0, %s35
      %s52 = sphi 0, %s36
      %s58 = sphi 0, %s60
      %s61 = sphi 0, %s58
      %s62 = sphi 0, %s61
      %s78 = sphi 0, %s62
      %s84 = sphi 0, %s86
      %s87 = sphi 0, %s84
      %s88 = sphi 0, %s87
      %s104 = sphi 0, %s88
      %s108 = sphi 0, %s108
      %s110 = sphi 0, %s108
      %s111 = sphi 0, %s110
      %s125 = sphi 0, %s111
      %s129 = sphi 0, %s129
      %s131 = sphi 0, %s129
      %s132 = sphi 0, %s131
      %s146 = sphi 0, %s132
      %s150 = sphi 0, %s150
      %s152 = sphi 0, %s150
      %s153 = sphi 0, %s152
      %s167 = sphi 0, %s153
      %s173 = sphi 0, %s175
      %s176 = sphi 0, %s173
      %s177 = sphi 0, %s176
      %s193 = sphi 0, %s177
      %s199 = sphi 0, %s201
      %s202 = sphi 0, %s199
      %s203 = sphi 0, %s202
      %s219 = sphi 0, %s203
    $region4: #{tpu_custom_call.1} parent=1 // loop_header_branch
      %25 = sbr.rel (%p23) target = $region8
    $region5: #{tpu_custom_call.1} parent=1 // loop_body
      %s27 = ssub.s32 %s22, 1
      %s28 = ssub.s32 %s22, 2
      %s29 = sadd.s32 %s22, 1
      %s30 = ssub.s32 %s22, %s29
      %p31 = scmp.eq.s32.totalorder %s30, 0
      %s33 = sadd.s32 %s32, 1
      %s34 = scalar_select %p31, %s32, %s33
      %p37 = pneg %p31
      %p38 = scmp.eq.s32.totalorder %s22, 1
      %p39 = por %p37, %p38
      %p40 = scmp.ne.s32.totalorder %s32, %s35
      %p41 = scmp.eq.s32.totalorder %s22, 0
      %p42 = por %p40, %p41
      %p43 = scmp.ne.s32.totalorder %s32, %s35
      %p44 = scmp.eq.s32.totalorder %s27, 1
      %p45 = por %p43, %p44
      %p46 = scmp.ne.s32.totalorder %s35, %s36
      %p47 = scmp.eq.s32.totalorder %s27, 0
      %p48 = por %p46, %p47
      %p49 = scmp.ne.s32.totalorder %s35, %s36
      %p50 = scmp.eq.s32.totalorder %s28, 1
      %p51 = por %p49, %p50
      %p53 = scmp.ne.s32.totalorder %s36, %s52
      %p54 = scmp.eq.s32.totalorder %s28, 0
      %p55 = por %p53, %p54
      %s56 = ssub.s32 %s22, %s29
      %p57 = scmp.eq.s32.totalorder %s56, 0
      %s59 = sadd.s32 %s58, 1
      %s60 = scalar_select %p57, %s58, %s59
      %p63 = pneg %p57
      %p64 = scmp.eq.s32.totalorder %s22, 1
      %p65 = por %p63, %p64
      %p66 = scmp.ne.s32.totalorder %s58, %s61
      %p67 = scmp.eq.s32.totalorder %s22, 0
      %p68 = por %p66, %p67
      %p69 = scmp.ne.s32.totalorder %s58, %s61
      %p70 = scmp.eq.s32.totalorder %s27, 1
      %p71 = por %p69, %p70
      %p72 = scmp.ne.s32.totalorder %s61, %s62
      %p73 = scmp.eq.s32.totalorder %s27, 0
      %p74 = por %p72, %p73
      %p75 = scmp.ne.s32.totalorder %s61, %s62
      %p76 = scmp.eq.s32.totalorder %s28, 1
      %p77 = por %p75, %p76
      %p79 = scmp.ne.s32.totalorder %s62, %s78
      %p80 = scmp.eq.s32.totalorder %s28, 0
      %p81 = por %p79, %p80
      %s82 = ssub.s32 %s22, %s29
      %p83 = scmp.eq.s32.totalorder %s82, 0
      %s85 = sadd.s32 %s84, 1
      %s86 = scalar_select %p83, %s84, %s85
      %p89 = pneg %p83
      %p90 = scmp.eq.s32.totalorder %s22, 1
      %p91 = por %p89, %p90
      %p92 = scmp.ne.s32.totalorder %s84, %s87
      %p93 = scmp.eq.s32.totalorder %s22, 0
      %p94 = por %p92, %p93
      %p95 = scmp.ne.s32.totalorder %s84, %s87
      %p96 = scmp.eq.s32.totalorder %s27, 1
      %p97 = por %p95, %p96
      %p98 = scmp.ne.s32.totalorder %s87, %s88
      %p99 = scmp.eq.s32.totalorder %s27, 0
      %p100 = por %p98, %p99
      %p101 = scmp.ne.s32.totalorder %s87, %s88
      %p102 = scmp.eq.s32.totalorder %s28, 1
      %p103 = por %p101, %p102
      %p105 = scmp.ne.s32.totalorder %s88, %s104
      %p106 = scmp.eq.s32.totalorder %s28, 0
      %p107 = por %p105, %p106
      %s109 = sadd.s32 %s108, 1
      %p112 = scmp.eq.s32.totalorder %s22, 1
      %p113 = scmp.ne.s32.totalorder %s108, %s110
      %p114 = scmp.eq.s32.totalorder %s22, 0
      %p115 = por %p113, %p114
      %p116 = scmp.ne.s32.totalorder %s108, %s110
      %p117 = scmp.eq.s32.totalorder %s27, 1
      %p118 = por %p116, %p117
      %p119 = scmp.ne.s32.totalorder %s110, %s111
      %p120 = scmp.eq.s32.totalorder %s27, 0
      %p121 = por %p119, %p120
      %p122 = scmp.ne.s32.totalorder %s110, %s111
      %p123 = scmp.eq.s32.totalorder %s28, 1
      %p124 = por %p122, %p123
      %p126 = scmp.ne.s32.totalorder %s111, %s125
      %p127 = scmp.eq.s32.totalorder %s28, 0
      %p128 = por %p126, %p127
      %s130 = sadd.s32 %s129, 1
      %p133 = scmp.eq.s32.totalorder %s22, 1
      %p134 = scmp.ne.s32.totalorder %s129, %s131
      %p135 = scmp.eq.s32.totalorder %s22, 0
      %p136 = por %p134, %p135
      %p137 = scmp.ne.s32.totalorder %s129, %s131
      %p138 = scmp.eq.s32.totalorder %s27, 1
      %p139 = por %p137, %p138
      %p140 = scmp.ne.s32.totalorder %s131, %s132
      %p141 = scmp.eq.s32.totalorder %s27, 0
      %p142 = por %p140, %p141
      %p143 = scmp.ne.s32.totalorder %s131, %s132
      %p144 = scmp.eq.s32.totalorder %s28, 1
      %p145 = por %p143, %p144
      %p147 = scmp.ne.s32.totalorder %s132, %s146
      %p148 = scmp.eq.s32.totalorder %s28, 0
      %p149 = por %p147, %p148
      %s151 = sadd.s32 %s150, 1
      %p154 = scmp.eq.s32.totalorder %s22, 1
      %p155 = scmp.ne.s32.totalorder %s150, %s152
      %p156 = scmp.eq.s32.totalorder %s22, 0
      %p157 = por %p155, %p156
      %p158 = scmp.ne.s32.totalorder %s150, %s152
      %p159 = scmp.eq.s32.totalorder %s27, 1
      %p160 = por %p158, %p159
      %p161 = scmp.ne.s32.totalorder %s152, %s153
      %p162 = scmp.eq.s32.totalorder %s27, 0
      %p163 = por %p161, %p162
      %p164 = scmp.ne.s32.totalorder %s152, %s153
      %p165 = scmp.eq.s32.totalorder %s28, 1
      %p166 = por %p164, %p165
      %p168 = scmp.ne.s32.totalorder %s153, %s167
      %p169 = scmp.eq.s32.totalorder %s28, 0
      %p170 = por %p168, %p169
      %s171 = ssub.s32 %s22, %s29
      %p172 = scmp.eq.s32.totalorder %s171, 0
      %s174 = sadd.s32 %s173, 1
      %s175 = scalar_select %p172, %s173, %s174
      %p178 = pneg %p172
      %p179 = scmp.eq.s32.totalorder %s22, 1
      %p180 = por %p178, %p179
      %p181 = scmp.ne.s32.totalorder %s173, %s176
      %p182 = scmp.eq.s32.totalorder %s22, 0
      %p183 = por %p181, %p182
      %p184 = scmp.ne.s32.totalorder %s173, %s176
      %p185 = scmp.eq.s32.totalorder %s27, 1
      %p186 = por %p184, %p185
      %p187 = scmp.ne.s32.totalorder %s176, %s177
      %p188 = scmp.eq.s32.totalorder %s27, 0
      %p189 = por %p187, %p188
      %p190 = scmp.ne.s32.totalorder %s176, %s177
      %p191 = scmp.eq.s32.totalorder %s28, 1
      %p192 = por %p190, %p191
      %p194 = scmp.ne.s32.totalorder %s177, %s193
      %p195 = scmp.eq.s32.totalorder %s28, 0
      %p196 = por %p194, %p195
      %s197 = ssub.s32 %s22, %s29
      %p198 = scmp.eq.s32.totalorder %s197, 0
      %s200 = sadd.s32 %s199, 1
      %s201 = scalar_select %p198, %s199, %s200
      %p204 = pneg %p198
      %p205 = scmp.eq.s32.totalorder %s22, 1
      %p206 = por %p204, %p205
      %p207 = scmp.ne.s32.totalorder %s199, %s202
      %p208 = scmp.eq.s32.totalorder %s22, 0
      %p209 = por %p207, %p208
      %p210 = scmp.ne.s32.totalorder %s199, %s202
      %p211 = scmp.eq.s32.totalorder %s27, 1
      %p212 = por %p210, %p211
      %p213 = scmp.ne.s32.totalorder %s202, %s203
      %p214 = scmp.eq.s32.totalorder %s27, 0
      %p215 = por %p213, %p214
      %p216 = scmp.ne.s32.totalorder %s202, %s203
      %p217 = scmp.eq.s32.totalorder %s28, 1
      %p218 = por %p216, %p217
      %p220 = scmp.ne.s32.totalorder %s203, %s219
      %p221 = scmp.eq.s32.totalorder %s28, 0
      %p222 = por %p220, %p221
      %p223 = scmp.le.s32.totalorder 1, %s22
      %p224 = scmp.lt.s32.totalorder %s22, 3
      %p225 = pnand %p223, %p224
      %p226 = pneg %p225
      // Predicated region
      $region9: #{tpu_custom_call.1} parent=5 // pred_check
        _
      $region10: #{tpu_custom_call.1} parent=5 // pred_check_branch
        %228 = sbr.rel (%p225) target = $region12
      $region11: #{tpu_custom_call.1} parent=5 // pred_region
        %s229 = ssub.s32 %s22, 1
        // Predicated region
        $region13: #{tpu_custom_call.1} parent=11 // pred_check
          %p230 = pneg %p121
        $region14: #{tpu_custom_call.1} parent=11 // pred_check_branch
          %232 = sbr.rel (%p230) target = $region16
        $region15: #{tpu_custom_call.1} parent=11 // pred_region
          %s234 = ssub.s32 512, 512
          %235 = vsyncadd [#allocation6], %s234
          %s236 = sshll.u32 [#allocation5], 4
          %s237 = int_to_ptr.vmem [resolvable:$true] %s236
          %242 = dma.hbm_to_vmem [thread:$0]  %s3, 512, %s237, [#allocation6], 64, 64, 4
        $region16: #{tpu_custom_call.1} parent=11 // pred_fallthru
          _
        // Predicated region
        $region17: #{tpu_custom_call.1} parent=11 // pred_check
          %p243 = pneg %p142
        $region18: #{tpu_custom_call.1} parent=11 // pred_check_branch
          %245 = sbr.rel (%p243) target = $region20
        $region19: #{tpu_custom_call.1} parent=11 // pred_region
          %s247 = ssub.s32 1024, 1024
          %248 = vsyncadd [#allocation6], %s247
          %s249 = sshll.u32 [#allocation7], 4
          %s250 = int_to_ptr.vmem [resolvable:$true] %s249
          %255 = dma.hbm_to_vmem [thread:$0]  %s4, 1024, %s250, [#allocation6], 64, 64, 4
        $region20: #{tpu_custom_call.1} parent=11 // pred_fallthru
          _
        // Predicated region
        $region21: #{tpu_custom_call.1} parent=11 // pred_check
          %p256 = pneg %p163
        $region22: #{tpu_custom_call.1} parent=11 // pred_check_branch
          %258 = sbr.rel (%p256) target = $region24
        $region23: #{tpu_custom_call.1} parent=11 // pred_region
          %s260 = ssub.s32 512, 512
          %261 = vsyncadd [#allocation9], %s260
          %s262 = sshll.u32 [#allocation8], 4
          %s263 = int_to_ptr.vmem [resolvable:$true] %s262
          %268 = dma.hbm_to_vmem [thread:$0]  %s5, 512, %s263, [#allocation9], 64, 64, 4
        $region24: #{tpu_custom_call.1} parent=11 // pred_fallthru
          _
      $region12: #{tpu_custom_call.1} parent=5 // pred_fallthru
        _
      %p269 = scmp.lt.s32.totalorder %s22, 2
      // Predicated region
      $region25: #{tpu_custom_call.1} parent=5 // pred_check
        %p270 = pneg %p269
      $region26: #{tpu_custom_call.1} parent=5 // pred_check_branch
        %272 = sbr.rel (%p270) target = $region28
      $region27: #{tpu_custom_call.1} parent=5 // pred_region
        // Predicated region
        $region29: #{tpu_custom_call.1} parent=27 // pred_check
          %p273 = pneg %p42
        $region30: #{tpu_custom_call.1} parent=27 // pred_check_branch
          %275 = sbr.rel (%p273) target = $region32
        $region31: #{tpu_custom_call.1} parent=27 // pred_region
          %p276 = scmp.lt.s32.totalorder %s22, 1
          %s277 = scalar_select %p276, %s22, 1
          %s278 = smul.addr %s277, 4
          %s279 = scalar_lea.vmem %s0, %s278
        $region32: #{tpu_custom_call.1} parent=27 // pred_fallthru
          _
        // Predicated region
        $region33: #{tpu_custom_call.1} parent=27 // pred_check
          %p280 = pneg %p68
        $region34: #{tpu_custom_call.1} parent=27 // pred_check_branch
          %282 = sbr.rel (%p280) target = $region36
        $region35: #{tpu_custom_call.1} parent=27 // pred_region
          %s283 = sand.u32 %s58, 1
          %s284 = scalar_lea.sflag [#allocation3], %s283
          %s285 = sand.u32 %s58, 1
          %s286 = smul.addr %s285, 32
          %s287 = scalar_lea.vmem [#allocation2], %s286
          %s288 = smul.u32 8, %s22
          %s290 = ssub.s32 512, 512
          %291 = vsyncadd %s284, %s290
          %s292 = smul.addr %s288, 64
          %s293 = scalar_lea.hbm %s1, %s292
          %s294 = sshll.u32 %s287, 4
          %s295 = int_to_ptr.vmem [resolvable:$true] %s294
          %300 = dma.hbm_to_vmem [thread:$0]  %s293, 512, %s295, %s284, 64, 64, 4
        $region36: #{tpu_custom_call.1} parent=27 // pred_fallthru
          _
        // Predicated region
        $region37: #{tpu_custom_call.1} parent=27 // pred_check
          %p301 = pneg %p94
        $region38: #{tpu_custom_call.1} parent=27 // pred_check_branch
          %303 = sbr.rel (%p301) target = $region40
        $region39: #{tpu_custom_call.1} parent=27 // pred_region
          %p304 = scmp.lt.s32.totalorder %s22, 1
          %s305 = scalar_select %p304, %s22, 1
          %s306 = smul.addr %s305, 8
          %s307 = scalar_lea.vmem %s2, %s306
        $region40: #{tpu_custom_call.1} parent=27 // pred_fallthru
          _
      $region28: #{tpu_custom_call.1} parent=5 // pred_fallthru
        _
      %p308 = scmp.le.s32.totalorder 1, %s22
      %p309 = scmp.lt.s32.totalorder %s22, 3
      %p310 = pnand %p308, %p309
      %p311 = pneg %p310
      // Predicated region
      $region41: #{tpu_custom_call.1} parent=5 // pred_check
        _
      $region42: #{tpu_custom_call.1} parent=5 // pred_check_branch
        %313 = sbr.rel (%p310) target = $region44
      $region43: #{tpu_custom_call.1} parent=5 // pred_region
        %s314 = ssub.s32 %s22, 1
        %s315 = sand.u32 %s61, 1
        %s316 = scalar_lea.sflag [#allocation3], %s315
        %s317 = sand.u32 %s61, 1
        %s318 = smul.addr %s317, 32
        %s319 = scalar_lea.vmem [#allocation2], %s318
        // Predicated region
        $region45: #{tpu_custom_call.1} parent=43 // pred_check
          %p320 = pneg %p74
        $region46: #{tpu_custom_call.1} parent=43 // pred_check_branch
          %322 = sbr.rel (%p320) target = $region48
        $region47: #{tpu_custom_call.1} parent=43 // pred_region
          %323 = dma.done %s316, 512
        $region48: #{tpu_custom_call.1} parent=43 // pred_fallthru
          _
        // Predicated region
        $region49: #{tpu_custom_call.1} parent=43 // pred_check
          %p324 = pneg %p121
        $region50: #{tpu_custom_call.1} parent=43 // pred_check_branch
          %326 = sbr.rel (%p324) target = $region52
        $region51: #{tpu_custom_call.1} parent=43 // pred_region
          %327 = dma.done [#allocation6], 512
        $region52: #{tpu_custom_call.1} parent=43 // pred_fallthru
          _
        // Predicated region
        $region53: #{tpu_custom_call.1} parent=43 // pred_check
          %p328 = pneg %p142
        $region54: #{tpu_custom_call.1} parent=43 // pred_check_branch
          %330 = sbr.rel (%p328) target = $region56
        $region55: #{tpu_custom_call.1} parent=43 // pred_region
          %331 = dma.done [#allocation6], 1024
        $region56: #{tpu_custom_call.1} parent=43 // pred_fallthru
          _
        // Predicated region
        $region57: #{tpu_custom_call.1} parent=43 // pred_check
          %p332 = pneg %p163
        $region58: #{tpu_custom_call.1} parent=43 // pred_check_branch
          %334 = sbr.rel (%p332) target = $region60
        $region59: #{tpu_custom_call.1} parent=43 // pred_region
          %335 = dma.done [#allocation9], 512
        $region60: #{tpu_custom_call.1} parent=43 // pred_fallthru
          _
        %p336 = scmp.lt.s32.totalorder %s27, 1
        %s337 = scalar_select %p336, %s27, 1
        %s338 = smul.addr %s337, 4
        %s339 = scalar_lea.vmem %s0, %s338
        %p340 = pneg %p48
        %p341 = pneg %p45
        %s342 = sand.u32 %s61, 1
        %s343 = scalar_lea.sflag [#allocation3], %s342
        %s344 = sand.u32 %s61, 1
        %s345 = smul.addr %s344, 32
        %s346 = scalar_lea.vmem [#allocation2], %s345
        %p347 = pneg %p74
        %p348 = pneg %p71
        %p349 = scmp.lt.s32.totalorder %s27, 1
        %s350 = scalar_select %p349, %s27, 1
        %s351 = smul.addr %s350, 8
        %s352 = scalar_lea.vmem %s2, %s351
        %p353 = pneg %p100
        %p354 = pneg %p97
        %p355 = pneg %p121
        %p356 = pneg %p118
        %p357 = pneg %p142
        %p358 = pneg %p139
        %p359 = pneg %p163
        %p360 = pneg %p160
        %p361 = pneg %p189
        %p362 = pneg %p186
        %s363 = sand.u32 %s176, 1
        %s364 = scalar_lea.sflag [#allocation4], %s363
        %s365 = sand.u32 %s176, 1
        %s366 = smul.addr %s365, 4
        %s367 = scalar_lea.vmem [#allocation10], %s366
        %p368 = pneg %p215
        %p369 = pneg %p212
        %p370 = scmp.lt.s32.totalorder %s27, 1
        %s371 = scalar_select %p370, %s27, 1
        %s372 = smul.addr %s371, 8
        %s373 = scalar_lea.vmem %s7, %s372
        %p374 = scmp.lt.s32.totalorder %s27, 1
        %s375 = scalar_select %p374, %s27, 1
        %s376 = smul.addr %s375, 4
        %s377 = scalar_lea.vmem %s0, %s376
        %s378 = smul.u32 8, %s27
        %p379 = scmp.lt.s32.totalorder %s27, 1
        %s380 = scalar_select %p379, %s27, 1
        %s381 = smul.addr %s380, 8
        %s382 = scalar_lea.vmem %s2, %s381
        %p383 = scmp.lt.s32.totalorder %s27, 1
        %s384 = scalar_select %p383, %s27, 1
        %s385 = smul.addr %s384, 8
        %s386 = scalar_lea.vmem %s7, %s385
        %v388 = vld [vmem:[%s377] sm:$0xf]
        %v389 = vld [vmem:[#allocation5] sm:$0xf]
        %v390 = vld [vmem:[#allocation5 + $0x4] sm:$0xf]
        %v391 = vld [vmem:[#allocation5 + $0x8] sm:$0xf]
        %v392 = vld [vmem:[#allocation5 + $0xc] sm:$0xf]
        %v393 = vld [vmem:[#allocation5 + $0x10] sm:$0xf]
        %v394 = vld [vmem:[#allocation5 + $0x14] sm:$0xf]
        %v395 = vld [vmem:[#allocation5 + $0x18] sm:$0xf]
        %v396 = vld [vmem:[#allocation5 + $0x1c] sm:$0xf]
        %v405 = vunpack.c.l.b16 %v389
        %v406 = vunpack.c.l.b16 %v390
        %v407 = vunpack.c.l.b16 %v391
        %v408 = vunpack.c.l.b16 %v392
        %v409 = vunpack.c.l.b16 %v393
        %v410 = vunpack.c.l.b16 %v394
        %v411 = vunpack.c.l.b16 %v395
        %v412 = vunpack.c.l.b16 %v396
        %v413 = vpack.c.b16 %v406, %v405
        %v414 = vpack.c.b16 %v408, %v407
        %v415 = vpack.c.b16 %v410, %v409
        %v416 = vpack.c.b16 %v412, %v411
        %vm421 = vcmask 523264
        %v423 = vsel %vm421, %v388, 0
        %425 = vmatprep.subr.bf16.mxu0 0
        %426 = vmatpush1.bf16.msra.mxu0 0
        %427 = vmatprep.subr.bf16.mxu0 0
        %428 = vmatpush1.bf16.msra.mxu0 0
        %429 = vmatprep.subr.bf16.mxu0 0
        %430 = vmatpush1.bf16.msra.mxu0 0
        %431 = vmatprep.subr.bf16.mxu0 0
        %432 = vmatpush1.bf16.msra.mxu0 0
        %433 = vmatprep.subr.bf16.mxu0 0
        %434 = vmatpush1.bf16.msra.mxu0 %v416
        %435 = vmatprep.subr.bf16.mxu0 0
        %436 = vmatpush1.bf16.msra.mxu0 %v415
        %437 = vmatprep.subr.bf16.mxu0 0
        %438 = vmatpush1.bf16.msra.mxu0 %v414
        %439 = vmatprep.subr.bf16.mxu0 0
        %440 = vmatpush1.bf16.msra.mxu0 %v413
        %441 = vmatprep.subr.bf16.mxu0 0
        %442 = vmatpush2.bf16.msra.mxu0 0
        %443 = vmatprep.subr.bf16.mxu0 0
        %444 = vmatpush2.bf16.msra.mxu0 0
        %445 = vmatprep.subr.bf16.mxu0 0
        %446 = vmatpush2.bf16.msra.mxu0 0
        %447 = vmatprep.subr.bf16.mxu0 0
        %448 = vmatpush2.bf16.msra.mxu0 0
        %449 = vmatprep.subr.bf16.mxu0 0
        %450 = vmatpush2.bf16.msra.mxu0 0
        %451 = vmatprep.subr.bf16.mxu0 0
        %452 = vmatpush2.bf16.msra.mxu0 0
        %453 = vmatprep.subr.bf16.mxu0 0
        %454 = vmatpush2.bf16.msra.mxu0 0
        %455 = vmatprep.subr.bf16.mxu0 0
        %456 = vmatpush2.bf16.msra.mxu0 0
        %457 = vmatprep.mubr.bf16.mxu0 0
        %458 = vmatmul.mubr.bf16.gmra.mxu0 %v423
        %v459 = vpop.f32.mrf.mxu0
        %v460 = vadd.f32 0.0, %v459
        %v461 = vpop.f32.mrf.mxu0
        %v462 = vpop.f32.mrf.mxu0
        %v463 = vpop.f32.mrf.mxu0
        %464 = vdwg.mxu0
        %v465 = vld [vmem:[%s319] sm:$0xf]
        %v466 = vld [vmem:[%s319 + $0x4] sm:$0xf]
        %v467 = vld [vmem:[%s319 + $0x8] sm:$0xf]
        %v468 = vld [vmem:[%s319 + $0xc] sm:$0xf]
        %v469 = vld [vmem:[%s319 + $0x10] sm:$0xf]
        %v470 = vld [vmem:[%s319 + $0x14] sm:$0xf]
        %v471 = vld [vmem:[%s319 + $0x18] sm:$0xf]
        %v472 = vld [vmem:[%s319 + $0x1c] sm:$0xf]
        %v473 = vunpack.c.l.bf16 %v465
        %v474 = vunpack.c.l.bf16 %v466
        %v475 = vunpack.c.l.bf16 %v467
        %v476 = vunpack.c.l.bf16 %v468
        %v477 = vunpack.c.l.bf16 %v469
        %v478 = vunpack.c.l.bf16 %v470
        %v479 = vunpack.c.l.bf16 %v471
        %v480 = vunpack.c.l.bf16 %v472
        %v482 = vcombine.high %v460, %v460
        %v484 = vunpack.c.l.s4 1966171168
        %v485 = vunpack.c.0.s8 %v484
        %v486 = vlaneseq
        %v487 = vshrl.u32 %v486, 7
        %v488 = vsub.s32 %v485, %v487
        %v489 = vrot.slane %v460, %v488
        %v491 = vunpack.c.l.s4 1966171168
        %v492 = vunpack.c.0.s8 %v491
        %v493 = vlaneseq
        %v494 = vshrl.u32 %v493, 7
        %v495 = vsub.s32 %v492, %v494
        %v496 = vrot.slane %v482, %v495
        %v497 = vcombine.high %v489, %v489
        %v498 = vcombine.high %v496, %v496
        %v500 = vunpack.c.l.s4 1966171168
        %v501 = vunpack.c.0.s8 %v500
        %v502 = vlaneseq
        %v503 = vshrl.u32 %v502, 7
        %v504 = vsub.s32 %v501, %v503
        %v505 = vrot.slane %v489, %v504
        %v507 = vunpack.c.l.s4 1966171168
        %v508 = vunpack.c.0.s8 %v507
        %v509 = vlaneseq
        %v510 = vshrl.u32 %v509, 7
        %v511 = vsub.s32 %v508, %v510
        %v512 = vrot.slane %v496, %v511
        %v514 = vunpack.c.l.s4 1966171168
        %v515 = vunpack.c.0.s8 %v514
        %v516 = vlaneseq
        %v517 = vshrl.u32 %v516, 7
        %v518 = vsub.s32 %v515, %v517
        %v519 = vrot.slane %v497, %v518
        %v521 = vunpack.c.l.s4 1966171168
        %v522 = vunpack.c.0.s8 %v521
        %v523 = vlaneseq
        %v524 = vshrl.u32 %v523, 7
        %v525 = vsub.s32 %v522, %v524
        %v526 = vrot.slane %v498, %v525
        %v527 = vcombine.high %v505, %v505
        %v528 = vcombine.high %v512, %v512
        %v529 = vcombine.high %v519, %v519
        %v530 = vcombine.high %v526, %v526
        %v531 = vlaneseq
        %v532 = vshrl.u32 %v531, 7
        %v533 = vsub.s32 0, %v532
        %v534 = vrot.slane %v505, %v533
        %v535 = vlaneseq
        %v536 = vshrl.u32 %v535, 7
        %v537 = vsub.s32 0, %v536
        %v538 = vrot.slane %v519, %v537
        %v539 = vlaneseq
        %v540 = vshrl.u32 %v539, 7
        %v541 = vsub.s32 0, %v540
        %v542 = vrot.slane %v527, %v541
        %v543 = vlaneseq
        %v544 = vshrl.u32 %v543, 7
        %v545 = vsub.s32 0, %v544
        %v546 = vrot.slane %v529, %v545
        %v547 = vlaneseq
        %v548 = vshrl.u32 %v547, 7
        %v549 = vsub.s32 0, %v548
        %v550 = vrot.slane %v512, %v549
        %v551 = vlaneseq
        %v552 = vshrl.u32 %v551, 7
        %v553 = vsub.s32 0, %v552
        %v554 = vrot.slane %v526, %v553
        %v555 = vlaneseq
        %v556 = vshrl.u32 %v555, 7
        %v557 = vsub.s32 0, %v556
        %v558 = vrot.slane %v528, %v557
        %v559 = vlaneseq
        %v560 = vshrl.u32 %v559, 7
        %v561 = vsub.s32 0, %v560
        %v562 = vrot.slane %v530, %v561
        %v571 = vmul.f32 %v473, %v534
        %v572 = vmul.f32 %v474, %v538
        %v573 = vmul.f32 %v475, %v542
        %v574 = vmul.f32 %v476, %v546
        %v575 = vmul.f32 %v477, %v550
        %v576 = vmul.f32 %v478, %v554
        %v577 = vmul.f32 %v479, %v558
        %v578 = vmul.f32 %v480, %v562
        %579 = vadd.xlane.f32.xlu0 %v571
        %v580 = vpop.xlane.xlu0 %579
        %581 = vadd.xlane.f32.xlu0 %v572
        %v582 = vpop.xlane.xlu0 %581
        %583 = vadd.xlane.f32.xlu0 %v573
        %v584 = vpop.xlane.xlu0 %583
        %585 = vadd.xlane.f32.xlu0 %v574
        %v586 = vpop.xlane.xlu0 %585
        %587 = vadd.xlane.f32.xlu0 %v575
        %v588 = vpop.xlane.xlu0 %587
        %589 = vadd.xlane.f32.xlu0 %v576
        %v590 = vpop.xlane.xlu0 %589
        %591 = vadd.xlane.f32.xlu0 %v577
        %v592 = vpop.xlane.xlu0 %591
        %593 = vadd.xlane.f32.xlu0 %v578
        %v594 = vpop.xlane.xlu0 %593
        %v595 = vlaneseq
        %v596 = vand.u32 %v595, 127
        %v597 = vld [vmem:[%s382] sm:$0xff]
        %598 = vset.pattern.permute.xlu0 0
        %599 = vperm.xlu0 %598, %v597
        %v600 = vpop.permute.xlu0 %599
        %vm601 = vcmp.lt.s32.totalorder %v596, %v600
        %v610 = vlaneseq
        %v611 = vshrl.u32 %v610, 7
        %v612 = vsub.s32 %v596, %v611
        %v613 = vrot.slane %v580, %v612
        %v614 = vlaneseq
        %v615 = vshrl.u32 %v614, 7
        %v616 = vsub.s32 %v596, %v615
        %v617 = vrot.slane %v582, %v616
        %v618 = vlaneseq
        %v619 = vshrl.u32 %v618, 7
        %v620 = vsub.s32 %v596, %v619
        %v621 = vrot.slane %v584, %v620
        %v622 = vlaneseq
        %v623 = vshrl.u32 %v622, 7
        %v624 = vsub.s32 %v596, %v623
        %v625 = vrot.slane %v586, %v624
        %v626 = vlaneseq
        %v627 = vshrl.u32 %v626, 7
        %v628 = vsub.s32 %v596, %v627
        %v629 = vrot.slane %v588, %v628
        %v630 = vlaneseq
        %v631 = vshrl.u32 %v630, 7
        %v632 = vsub.s32 %v596, %v631
        %v633 = vrot.slane %v590, %v632
        %v634 = vlaneseq
        %v635 = vshrl.u32 %v634, 7
        %v636 = vsub.s32 %v596, %v635
        %v637 = vrot.slane %v592, %v636
        %v638 = vlaneseq
        %v639 = vshrl.u32 %v638, 7
        %v640 = vsub.s32 %v596, %v639
        %v641 = vrot.slane %v594, %v640
        %vm642 = vcmask 1041409
        %v643 = vsel %vm642, %v617, %v613
        %vm644 = vcmask 1042434
        %v645 = vsel %vm644, %v621, %v643
        %vm646 = vcmask 1043459
        %v647 = vsel %vm646, %v625, %v645
        %vm648 = vcmask 1044484
        %v649 = vsel %vm648, %v629, %v647
        %vm650 = vcmask 1045509
        %v651 = vsel %vm650, %v633, %v649
        %vm652 = vcmask 1046534
        %v653 = vsel %vm652, %v637, %v651
        %vm654 = vcmask 1047559
        %v655 = vsel %vm654, %v641, %v653
        %v657 = vsel %vm601, %v655, -1e+30
        %vm658 = vcmask 64512
        %v659 = vsel %vm658, %v657, -inf
        %660 = vmax.xlane.f32.xlu0 %v659
        %v661 = vpop.xlane.xlu0 %660
        %v662 = vsub.f32 %v657, %v661
        %v663 = vmul.f32 %v662, 1.442695
        %v664 = vpow.pop %v663
        %v665 = vsel %vm658, %v664, 0.0
        %666 = vadd.xlane.f32.xlu0 %v665
        %v667 = vpop.xlane.xlu0 %666
        %v668 = vrcp.pop %v667
        %v669 = vmul.f32 %v664, %v668
        %670 = vst.msk [vmem:[%s386] sm:$0xff] %vm658, %v669
        %v671 = vlaneseq
        %v672 = vshrl.u32 %v671, 7
        %v673 = vsub.s32 0, %v672
        %v674 = vrot.slane %v669, %v673
        %676 = vbcast.lane.b32.xlu0 %v674, 256
        %v677 = vpop.permute.xlu0 %676
        %v678 = vlaneseq
        %v679 = vshrl.u32 %v678, 7
        %v680 = vsub.s32 1, %v679
        %v681 = vrot.slane %v669, %v680
        %683 = vbcast.lane.b32.xlu0 %v681, 256
        %v684 = vpop.permute.xlu0 %683
        %v685 = vlaneseq
        %v686 = vshrl.u32 %v685, 7
        %v687 = vsub.s32 2, %v686
        %v688 = vrot.slane %v669, %v687
        %690 = vbcast.lane.b32.xlu0 %v688, 256
        %v691 = vpop.permute.xlu0 %690
        %v692 = vlaneseq
        %v693 = vshrl.u32 %v692, 7
        %v694 = vsub.s32 3, %v693
        %v695 = vrot.slane %v669, %v694
        %697 = vbcast.lane.b32.xlu0 %v695, 256
        %v698 = vpop.permute.xlu0 %697
        %v699 = vlaneseq
        %v700 = vshrl.u32 %v699, 7
        %v701 = vsub.s32 4, %v700
        %v702 = vrot.slane %v669, %v701
        %704 = vbcast.lane.b32.xlu0 %v702, 256
        %v705 = vpop.permute.xlu0 %704
        %v706 = vlaneseq
        %v707 = vshrl.u32 %v706, 7
        %v708 = vsub.s32 5, %v707
        %v709 = vrot.slane %v669, %v708
        %711 = vbcast.lane.b32.xlu0 %v709, 256
        %v712 = vpop.permute.xlu0 %711
        %v713 = vlaneseq
        %v714 = vshrl.u32 %v713, 7
        %v715 = vsub.s32 6, %v714
        %v716 = vrot.slane %v669, %v715
        %718 = vbcast.lane.b32.xlu0 %v716, 256
        %v719 = vpop.permute.xlu0 %718
        %v720 = vlaneseq
        %v721 = vshrl.u32 %v720, 7
        %v722 = vsub.s32 7, %v721
        %v723 = vrot.slane %v669, %v722
        %725 = vbcast.lane.b32.xlu0 %v723, 256
        %v726 = vpop.permute.xlu0 %725
        %v727 = vld [vmem:[%s319] sm:$0xf]
        %v728 = vld [vmem:[%s319 + $0x4] sm:$0xf]
        %v729 = vld [vmem:[%s319 + $0x8] sm:$0xf]
        %v730 = vld [vmem:[%s319 + $0xc] sm:$0xf]
        %v731 = vld [vmem:[%s319 + $0x10] sm:$0xf]
        %v732 = vld [vmem:[%s319 + $0x14] sm:$0xf]
        %v733 = vld [vmem:[%s319 + $0x18] sm:$0xf]
        %v734 = vld [vmem:[%s319 + $0x1c] sm:$0xf]
        %v735 = vunpack.c.l.bf16 %v727
        %v736 = vunpack.c.l.bf16 %v728
        %v737 = vunpack.c.l.bf16 %v729
        %v738 = vunpack.c.l.bf16 %v730
        %v739 = vunpack.c.l.bf16 %v731
        %v740 = vunpack.c.l.bf16 %v732
        %v741 = vunpack.c.l.bf16 %v733
        %v742 = vunpack.c.l.bf16 %v734
        %v743 = vmul.f32 %v677, %v735
        %v744 = vmul.f32 %v684, %v736
        %v745 = vmul.f32 %v691, %v737
        %v746 = vmul.f32 %v698, %v738
        %v747 = vmul.f32 %v705, %v739
        %v748 = vmul.f32 %v712, %v740
        %v749 = vmul.f32 %v719, %v741
        %v750 = vmul.f32 %v726, %v742
        %v751 = vrot.slane %v743, 4
        %v752 = vadd.f32 %v743, %v751
        %v753 = vrot.slane %v752, 2
        %v754 = vadd.f32 %v752, %v753
        %v755 = vrot.slane %v754, 1
        %v756 = vadd.f32 %v754, %v755
        %v757 = vrot.slane %v744, 4
        %v758 = vadd.f32 %v744, %v757
        %v759 = vrot.slane %v758, 2
        %v760 = vadd.f32 %v758, %v759
        %v761 = vrot.slane %v760, 1
        %v762 = vadd.f32 %v760, %v761
        %v763 = vrot.slane %v745, 4
        %v764 = vadd.f32 %v745, %v763
        %v765 = vrot.slane %v764, 2
        %v766 = vadd.f32 %v764, %v765
        %v767 = vrot.slane %v766, 1
        %v768 = vadd.f32 %v766, %v767
        %v769 = vrot.slane %v746, 4
        %v770 = vadd.f32 %v746, %v769
        %v771 = vrot.slane %v770, 2
        %v772 = vadd.f32 %v770, %v771
        %v773 = vrot.slane %v772, 1
        %v774 = vadd.f32 %v772, %v773
        %v775 = vrot.slane %v747, 4
        %v776 = vadd.f32 %v747, %v775
        %v777 = vrot.slane %v776, 2
        %v778 = vadd.f32 %v776, %v777
        %v779 = vrot.slane %v778, 1
        %v780 = vadd.f32 %v778, %v779
        %v781 = vrot.slane %v748, 4
        %v782 = vadd.f32 %v748, %v781
        %v783 = vrot.slane %v782, 2
        %v784 = vadd.f32 %v782, %v783
        %v785 = vrot.slane %v784, 1
        %v786 = vadd.f32 %v784, %v785
        %v787 = vrot.slane %v749, 4
        %v788 = vadd.f32 %v749, %v787
        %v789 = vrot.slane %v788, 2
        %v790 = vadd.f32 %v788, %v789
        %v791 = vrot.slane %v790, 1
        %v792 = vadd.f32 %v790, %v791
        %v793 = vrot.slane %v750, 4
        %v794 = vadd.f32 %v750, %v793
        %v795 = vrot.slane %v794, 2
        %v796 = vadd.f32 %v794, %v795
        %v797 = vrot.slane %v796, 1
        %v798 = vadd.f32 %v796, %v797
        %v799 = vpack.c.bf16 %v756, %v756
        %v800 = vpack.c.bf16 %v762, %v762
        %v801 = vpack.c.bf16 %v768, %v768
        %v802 = vpack.c.bf16 %v774, %v774
        %v803 = vpack.c.bf16 %v780, %v780
        %v804 = vpack.c.bf16 %v786, %v786
        %v805 = vpack.c.bf16 %v792, %v792
        %v806 = vpack.c.bf16 %v798, %v798
        %v807 = vld [vmem:[#allocation7] sm:$0xf]
        %v808 = vld [vmem:[#allocation7 + $0x4] sm:$0xf]
        %v809 = vld [vmem:[#allocation7 + $0x8] sm:$0xf]
        %v810 = vld [vmem:[#allocation7 + $0xc] sm:$0xf]
        %v811 = vld [vmem:[#allocation7 + $0x10] sm:$0xf]
        %v812 = vld [vmem:[#allocation7 + $0x14] sm:$0xf]
        %v813 = vld [vmem:[#allocation7 + $0x18] sm:$0xf]
        %v814 = vld [vmem:[#allocation7 + $0x1c] sm:$0xf]
        %v815 = vld [vmem:[#allocation7 + $0x20] sm:$0xf]
        %v816 = vld [vmem:[#allocation7 + $0x24] sm:$0xf]
        %v817 = vld [vmem:[#allocation7 + $0x28] sm:$0xf]
        %v818 = vld [vmem:[#allocation7 + $0x2c] sm:$0xf]
        %v819 = vld [vmem:[#allocation7 + $0x30] sm:$0xf]
        %v820 = vld [vmem:[#allocation7 + $0x34] sm:$0xf]
        %v821 = vld [vmem:[#allocation7 + $0x38] sm:$0xf]
        %v822 = vld [vmem:[#allocation7 + $0x3c] sm:$0xf]
        %v823 = vld [vmem:[#allocation8] sm:$0xf]
        %v824 = vld [vmem:[#allocation8 + $0x4] sm:$0xf]
        %v825 = vld [vmem:[#allocation8 + $0x8] sm:$0xf]
        %v826 = vld [vmem:[#allocation8 + $0xc] sm:$0xf]
        %v827 = vld [vmem:[#allocation8 + $0x10] sm:$0xf]
        %v828 = vld [vmem:[#allocation8 + $0x14] sm:$0xf]
        %v829 = vld [vmem:[#allocation8 + $0x18] sm:$0xf]
        %v830 = vld [vmem:[#allocation8 + $0x1c] sm:$0xf]
        %v839 = vunpack.c.l.b16 %v823
        %v840 = vunpack.c.l.b16 %v824
        %v841 = vunpack.c.l.b16 %v825
        %v842 = vunpack.c.l.b16 %v826
        %v843 = vunpack.c.l.b16 %v827
        %v844 = vunpack.c.l.b16 %v828
        %v845 = vunpack.c.l.b16 %v829
        %v846 = vunpack.c.l.b16 %v830
        %v847 = vpack.c.b16 %v840, %v839
        %v848 = vpack.c.b16 %v842, %v841
        %v849 = vpack.c.b16 %v844, %v843
        %v850 = vpack.c.b16 %v846, %v845
        %855 = vmatprep.subr.bf16.mxu0 0
        %856 = vmatpush1.bf16.msra.mxu0 0
        %857 = vmatprep.subr.bf16.mxu0 0
        %858 = vmatpush1.bf16.msra.mxu0 0
        %859 = vmatprep.subr.bf16.mxu0 0
        %860 = vmatpush1.bf16.msra.mxu0 0
        %861 = vmatprep.subr.bf16.mxu0 0
        %862 = vmatpush1.bf16.msra.mxu0 0
        %863 = vmatprep.subr.bf16.mxu0 0
        %864 = vmatpush1.bf16.msra.mxu0 %v850
        %865 = vmatprep.subr.bf16.mxu0 0
        %866 = vmatpush1.bf16.msra.mxu0 %v849
        %867 = vmatprep.subr.bf16.mxu0 0
        %868 = vmatpush1.bf16.msra.mxu0 %v848
        %869 = vmatprep.subr.bf16.mxu0 0
        %870 = vmatpush1.bf16.msra.mxu0 %v847
        %871 = vmatprep.subr.bf16.mxu0 0
        %872 = vmatpush2.bf16.msra.mxu0 0
        %873 = vmatprep.subr.bf16.mxu0 0
        %874 = vmatpush2.bf16.msra.mxu0 0
        %875 = vmatprep.subr.bf16.mxu0 0
        %876 = vmatpush2.bf16.msra.mxu0 0
        %877 = vmatprep.subr.bf16.mxu0 0
        %878 = vmatpush2.bf16.msra.mxu0 0
        %879 = vmatprep.subr.bf16.mxu0 0
        %880 = vmatpush2.bf16.msra.mxu0 0
        %881 = vmatprep.subr.bf16.mxu0 0
        %882 = vmatpush2.bf16.msra.mxu0 0
        %883 = vmatprep.subr.bf16.mxu0 0
        %884 = vmatpush2.bf16.msra.mxu0 0
        %885 = vmatprep.subr.bf16.mxu0 0
        %886 = vmatpush2.bf16.msra.mxu0 0
        %887 = vmatprep.mubr.bf16.mxu0 0
        %888 = vmatmul.mubr.bf16.gmra.mxu0 %v423
        %v889 = vpop.f32.mrf.mxu0
        %v890 = vadd.f32 0.0, %v889
        %v891 = vpop.f32.mrf.mxu0
        %v892 = vpop.f32.mrf.mxu0
        %v893 = vpop.f32.mrf.mxu0
        %894 = vdwg.mxu0
        %v903 = vunpack.c.l.b16 %v799
        %v904 = vunpack.c.l.b16 %v800
        %v905 = vunpack.c.l.b16 %v801
        %v906 = vunpack.c.l.b16 %v802
        %v907 = vunpack.c.l.b16 %v803
        %v908 = vunpack.c.l.b16 %v804
        %v909 = vunpack.c.l.b16 %v805
        %v910 = vunpack.c.l.b16 %v806
        %v911 = vsel %vm642, %v904, %v903
        %v912 = vsel %vm644, %v905, %v911
        %v913 = vsel %vm646, %v906, %v912
        %v914 = vsel %vm648, %v907, %v913
        %v915 = vsel %vm650, %v908, %v914
        %v916 = vsel %vm652, %v909, %v915
        %v917 = vsel %vm654, %v910, %v916
        %v918 = vpack.c.b16 %v917, %v917
        %v936 = vunpack.c.l.b16 %v807
        %v937 = vunpack.c.l.b16 %v808
        %v938 = vunpack.c.l.b16 %v809
        %v939 = vunpack.c.l.b16 %v810
        %v940 = vunpack.c.l.b16 %v811
        %v941 = vunpack.c.l.b16 %v812
        %v942 = vunpack.c.l.b16 %v813
        %v943 = vunpack.c.l.b16 %v814
        %v944 = vunpack.c.l.b16 %v815
        %v945 = vunpack.c.l.b16 %v816
        %v946 = vunpack.c.l.b16 %v817
        %v947 = vunpack.c.l.b16 %v818
        %v948 = vunpack.c.l.b16 %v819
        %v949 = vunpack.c.l.b16 %v820
        %v950 = vunpack.c.l.b16 %v821
        %v951 = vunpack.c.l.b16 %v822
        %v952 = vpack.c.b16 %v937, %v936
        %v953 = vpack.c.b16 %v939, %v938
        %v954 = vpack.c.b16 %v941, %v940
        %v955 = vpack.c.b16 %v943, %v942
        %v956 = vpack.c.b16 %v945, %v944
        %v957 = vpack.c.b16 %v947, %v946
        %v958 = vpack.c.b16 %v949, %v948
        %v959 = vpack.c.b16 %v951, %v950
        %968 = vmatprep.subr.bf16.mxu0 0
        %969 = vmatpush1.bf16.msra.mxu0 %v959
        %970 = vmatprep.subr.bf16.mxu0 0
        %971 = vmatpush1.bf16.msra.mxu0 %v958
        %972 = vmatprep.subr.bf16.mxu0 0
        %973 = vmatpush1.bf16.msra.mxu0 %v957
        %974 = vmatprep.subr.bf16.mxu0 0
        %975 = vmatpush1.bf16.msra.mxu0 %v956
        %976 = vmatprep.subr.bf16.mxu0 0
        %977 = vmatpush1.bf16.msra.mxu0 %v955
        %978 = vmatprep.subr.bf16.mxu0 0
        %979 = vmatpush1.bf16.msra.mxu0 %v954
        %980 = vmatprep.subr.bf16.mxu0 0
        %981 = vmatpush1.bf16.msra.mxu0 %v953
        %982 = vmatprep.subr.bf16.mxu0 0
        %983 = vmatpush1.bf16.msra.mxu0 %v952
        %984 = vmatprep.subr.bf16.mxu0 0
        %985 = vmatpush2.bf16.msra.mxu0 0
        %986 = vmatprep.subr.bf16.mxu0 0
        %987 = vmatpush2.bf16.msra.mxu0 0
        %988 = vmatprep.subr.bf16.mxu0 0
        %989 = vmatpush2.bf16.msra.mxu0 0
        %990 = vmatprep.subr.bf16.mxu0 0
        %991 = vmatpush2.bf16.msra.mxu0 0
        %992 = vmatprep.subr.bf16.mxu0 0
        %993 = vmatpush2.bf16.msra.mxu0 0
        %994 = vmatprep.subr.bf16.mxu0 0
        %995 = vmatpush2.bf16.msra.mxu0 0
        %996 = vmatprep.subr.bf16.mxu0 0
        %997 = vmatpush2.bf16.msra.mxu0 0
        %998 = vmatprep.subr.bf16.mxu0 0
        %999 = vmatpush2.bf16.msra.mxu0 0
        %1000 = vmatprep.mubr.bf16.mxu0 0
        %1001 = vmatmul.mubr.bf16.gmra.mxu0 %v918
        %v1002 = vpop.f32.mrf.mxu0
        %v1003 = vadd.f32 %v890, %v1002
        %v1004 = vpop.f32.mrf.mxu0
        %v1005 = vpop.f32.mrf.mxu0
        %v1006 = vpop.f32.mrf.mxu0
        %1007 = vdwg.mxu0
        %v1008 = vtanh.pop %v1003
        %v1009 = vpack.c.bf16 %v1008, %v1008
        %1010 = vst [vmem:[%s367] sm:$0xf] %v1009
        %s1011 = sand.u32 %s176, 1
        %s1012 = scalar_lea.sflag [#allocation4], %s1011
        %s1013 = sand.u32 %s176, 1
        %s1014 = smul.addr %s1013, 4
        %s1015 = scalar_lea.vmem [#allocation10], %s1014
        %p1016 = scmp.lt.s32.totalorder %s27, 1
        %s1017 = scalar_select %p1016, %s27, 1
        %s1018 = smul.addr %s1017, 8
        %s1019 = scalar_lea.vmem %s7, %s1018
        // Predicated region
        $region61: #{tpu_custom_call.1} parent=43 // pred_check
          %p1020 = pneg %p186
        $region62: #{tpu_custom_call.1} parent=43 // pred_check_branch
          %1022 = sbr.rel (%p1020) target = $region64
        $region63: #{tpu_custom_call.1} parent=43 // pred_region
          %s1024 = ssub.s32 64, 64
          %1025 = vsyncadd %s1012, %s1024
          %s1026 = smul.addr %s27, 64
          %s1027 = scalar_lea.hbm %s6, %s1026
          %s1029 = sshll.u32 %s1015, 4
          %s1030 = int_to_ptr.vmem [resolvable:$true] %s1029
          %1032 = dma.vmem_to_hbm [thread:$0]  %s1030, 64, %s1027, %s1012
        $region64: #{tpu_custom_call.1} parent=43 // pred_fallthru
          _
        // Predicated region
        $region65: #{tpu_custom_call.1} parent=43 // pred_check
          %p1033 = pneg %p212
        $region66: #{tpu_custom_call.1} parent=43 // pred_check_branch
          %1035 = sbr.rel (%p1033) target = $region68
        $region67: #{tpu_custom_call.1} parent=43 // pred_region
          _
        $region68: #{tpu_custom_call.1} parent=43 // pred_fallthru
          _
      $region44: #{tpu_custom_call.1} parent=5 // pred_fallthru
        _
      %p1036 = scmp.le.s32.totalorder 2, %s22
      // Predicated region
      $region69: #{tpu_custom_call.1} parent=5 // pred_check
        %p1037 = pneg %p1036
      $region70: #{tpu_custom_call.1} parent=5 // pred_check_branch
        %1039 = sbr.rel (%p1037) target = $region72
      $region71: #{tpu_custom_call.1} parent=5 // pred_region
        %s1040 = ssub.s32 %s22, 2
        // Predicated region
        $region73: #{tpu_custom_call.1} parent=71 // pred_check
          %p1041 = pneg %p192
        $region74: #{tpu_custom_call.1} parent=71 // pred_check_branch
          %1043 = sbr.rel (%p1041) target = $region76
        $region75: #{tpu_custom_call.1} parent=71 // pred_region
          %s1044 = sand.u32 %s177, 1
          %s1045 = scalar_lea.sflag [#allocation4], %s1044
          %s1046 = sand.u32 %s177, 1
          %s1047 = smul.addr %s1046, 4
          %s1048 = scalar_lea.vmem [#allocation10], %s1047
          %1049 = dma.done %s1045, 64
        $region76: #{tpu_custom_call.1} parent=71 // pred_fallthru
          _
        // Predicated region
        $region77: #{tpu_custom_call.1} parent=71 // pred_check
          %p1050 = pneg %p218
        $region78: #{tpu_custom_call.1} parent=71 // pred_check_branch
          %1052 = sbr.rel (%p1050) target = $region80
        $region79: #{tpu_custom_call.1} parent=71 // pred_region
          %p1053 = scmp.lt.s32.totalorder %s28, 1
          %s1054 = scalar_select %p1053, %s28, 1
          %s1055 = smul.addr %s1054, 8
          %s1056 = scalar_lea.vmem %s7, %s1055
        $region80: #{tpu_custom_call.1} parent=71 // pred_fallthru
          _
      $region72: #{tpu_custom_call.1} parent=5 // pred_fallthru
        _
    $region6: #{tpu_custom_call.1} parent=1 // loop_footer
      %s26 = sadd.s32 1, %s22
    $region7: #{tpu_custom_call.1} parent=1 // loop_footer_branch
      %21 = sbr.rel target = $region3
    $region8: #{tpu_custom_call.1} parent=1 // loop_exit
      _
    %1057 = vsyncpa [#allocation3], 1
    %s1058 = scalar_lea.sflag [#allocation3], 1
    %1059 = vsyncpa %s1058, 1
    %1060 = vsyncpa [#allocation6], 1
    %1061 = vsyncpa [#allocation9], 1
    %1062 = vsyncpa [#allocation4], 1
    %s1063 = scalar_lea.sflag [#allocation4], 1
    %1064 = vsyncpa %s1063, 1

</llo_original>
